<compile_context>
chip_gen: v7x
topology: tpu7x:2x2x1
jax: 0.10.0
libtpu: 0.0.40
codegen_flags: <defaults>
</compile_context>

<pallas_src>
from functools import partial

import numpy as np
import jax
import jax.numpy as jnp
from jax.experimental import pallas as pl
from jax.experimental.pallas import tpu as pltpu


def _round_up(x: int, m: int) -> int:
    return (x + m - 1) // m * m


def quantum_decoder_kernel(u_ref, g_ref, h_ref, out_ref):
    """Fused Re(z^H H z) per batch block.

    u_ref   : (TB, 2Q)        [zr | zi]
    g_ref   : (2Q, 4*2Q*Q)    constant one-hot gather matrix (resident block)
    h_ref   : (2Q*Q, Dp)      [Re(H) ; -Im(H)] flattened, lane-padded (resident block)
    out_ref : (TB, Dp)        lane-dense output block
    """
    kdim = h_ref.shape[0]                      # 2 * Q * Q
    u = u_ref[...]                             # (TB, 2Q) f32

    # One-hot gather of (zr_i, z*_j, zi_i, +/-z*_j) along the fused contraction
    # axis -- runs on the MXU instead of a VALU compare/select chain.
    g = jnp.dot(u, g_ref[...], preferred_element_type=jnp.float32)   # (TB, 4*kdim)

    # Gram planes: Pr on the first Q*Q lanes, Pi on the last Q*Q lanes.
    p = g[:, :kdim] * g[:, kdim:2 * kdim] + g[:, 2 * kdim:3 * kdim] * g[:, 3 * kdim:]

    # out[b, d] = sum_k P[b, k] * Hcat[k, d] -- single K = 2*Q*Q MXU matmul.
    out_ref[...] = jnp.dot(p, h_ref[...], preferred_element_type=jnp.float32)


def make_quantum_decoder_params(hermitian_base, constant_matrix):
    """Parameter-only precompute. Run once per parameter update, NOT per forward."""
    d, q, _ = hermitian_base.shape
    kdim = 2 * q * q
    dp = _round_up(d, 128)                     # lane-dense / unmasked stores

    # HermitianLayer forward: H = C .* A + (C .* A)^H  (depends only on params).
    a = jnp.asarray(hermitian_base, jnp.float32)             # (D, Q, Q)
    at = jnp.swapaxes(a, -1, -2)
    cr = jnp.real(constant_matrix).astype(jnp.float32)       # (Q, Q)
    ci = jnp.imag(constant_matrix).astype(jnp.float32)
    hr = cr[None] * a + cr.T[None] * at                      # Re(H)
    hi = ci[None] * a - ci.T[None] * at                      # Im(H)
    hcat = jnp.concatenate([hr.reshape(d, q * q),
                            -hi.reshape(d, q * q)], axis=1).T            # (2Q*Q, D)
    hcat = jnp.pad(hcat, ((0, 0), (0, dp - d)))                          # (2Q*Q, Dp)

    # Constant +/-1/0 gather matrices: g_a..g_d = u @ G_*, P = g_a*g_b + g_c*g_d.
    # The real/imag plane split and the -Im sign are folded in here.
    ga = np.zeros((2 * q, kdim), np.float32)
    gb = np.zeros_like(ga)
    gc = np.zeros_like(ga)
    gd = np.zeros_like(ga)
    for plane in range(2):
        for i in range(q):
            for j in range(q):
                k = plane * q * q + i * q + j
                ga[i, k] = 1.0                  # zr_i
                gc[q + i, k] = 1.0              # zi_i
                if plane == 0:                  # Pr = zr_i*zr_j + zi_i*zi_j
                    gb[j, k] = 1.0              # zr_j
                    gd[q + j, k] = 1.0          # zi_j
                else:                           # Pi = zr_i*zi_j - zi_i*zr_j
                    gb[q + j, k] = 1.0          # zi_j
                    gd[j, k] = -1.0             # -zr_j
    gcat = jnp.asarray(np.concatenate([ga, gb, gc, gd], axis=1))         # (2Q, 4*2Q*Q)

    return {"gcat": gcat, "hcat": hcat}


@partial(jax.jit, static_argnames=("input_dim",))
def quantum_decoder_apply(z_complex, gcat, hcat, *, input_dim):
    """Pallas implementation of QuantumDecoder.forward (given precomputed params).

    z_complex : (B, Q) complex64
    gcat      : (2Q, 4*2Q*Q) float32   constant gather matrix
    hcat      : (2Q*Q, Dp)   float32   flattened Hermitian weights (lane-padded)
    returns   : (B, input_dim) float32
    """
    b = z_complex.shape[0]
    _, dp = hcat.shape

    # Mosaic has no complex dtype: present z as one real (B, 2Q) plane.
    u = jnp.concatenate([jnp.real(z_complex), jnp.imag(z_complex)],
                        axis=1).astype(jnp.float32)

    # Batch tiling: small B -> one 8-sublane tile; large B -> 128-row blocks on a
    # parallel grid (shards across v7x's two TensorCores; no-op on v5e/v6e).
    if b <= 128:
        bp = _round_up(max(b, 8), 8)
        tb = bp
    else:
        tb = 128
        bp = _round_up(b, tb)
    if bp != b:
        u = jnp.pad(u, ((0, bp - b), (0, 0)))

    two_q = u.shape[1]

    out = pl.pallas_call(
        quantum_decoder_kernel,
        out_shape=jax.ShapeDtypeStruct((bp, dp), jnp.float32),
        grid_spec=pltpu.PrefetchScalarGridSpec(
            num_scalar_prefetch=0,
            grid=(bp // tb,),
            in_specs=[
                pl.BlockSpec((tb, two_q), lambda i: (i, 0)),     # u: per-block
                pl.BlockSpec(gcat.shape, lambda i: (0, 0)),      # Gcat: resident
                pl.BlockSpec(hcat.shape, lambda i: (0, 0)),      # Hcat: resident
            ],
            out_specs=pl.BlockSpec((tb, dp), lambda i: (i, 0)),
        ),
        compiler_params=pltpu.CompilerParams(
            dimension_semantics=("parallel",)),
    )(u, gcat, hcat)

    return out[:b, :input_dim]


if __name__ == "__main__":
    quantum_dim = 8     # Q
    input_dim = 32      # D
    batch = 4           # B

    key = jax.random.PRNGKey(0)
    k1, k2, k3 = jax.random.split(key, 3)

    # Deterministic "parameters" (shapes from HermitianLayer.__init__).
    hermitian_base = jax.random.normal(
        k1, (input_dim, quantum_dim, quantum_dim), dtype=jnp.float32)
    eye = jnp.eye(quantum_dim, dtype=jnp.float32)
    ones = jnp.ones((quantum_dim, quantum_dim), dtype=jnp.float32)
    constant_matrix = (0.5 * eye + jnp.triu(ones, k=1)
                       + 1j * jnp.tril(ones, k=-1)).astype(jnp.complex64)

    # Input z_complex: (B, Q) complex64.
    zr0 = jax.random.normal(k2, (batch, quantum_dim), dtype=jnp.float32)
    zi0 = jax.random.normal(k3, (batch, quantum_dim), dtype=jnp.float32)
    z_complex = (zr0 + 1j * zi0).astype(jnp.complex64)

    # Parameter-only precompute: done ONCE, outside the per-call path.
    params = make_quantum_decoder_params(hermitian_base, constant_matrix)

    out = quantum_decoder_apply(z_complex, params["gcat"], params["hcat"],
                                input_dim=input_dim)
    out = jax.block_until_ready(out)

    # Pure-JAX reference mirroring the torch einsum.
    structured = constant_matrix[None] * hermitian_base.astype(jnp.complex64)
    H = structured + jnp.conj(jnp.swapaxes(structured, -1, -2))
    ref = jnp.real(jnp.einsum('bi,dij,bj->bd', jnp.conj(z_complex), H, z_complex,
                              precision=jax.lax.Precision.HIGHEST))

    assert out.shape == (batch, input_dim)
    assert jnp.allclose(out, ref, atol=1e-3, rtol=1e-3)
    print("KERNEL_OK")
</pallas_src>

<mosaic_0001>
module attributes {stable_mosaic.version = 11 : i64} {
  func.func @quantum_decoder_kernel(%arg0: i32, %arg1: memref<8x16xf32, #tpu.memory_space<vmem>>, %arg2: memref<16x512xf32, #tpu.memory_space<vmem>>, %arg3: memref<128x128xf32, #tpu.memory_space<vmem>>, %arg4: memref<8x128xf32, #tpu.memory_space<vmem>>) attributes {dimension_semantics = [#tpu.dimension_semantics<parallel>], iteration_bounds = array<i64: 1>, scalar_prefetch = 0 : i64, scratch_operands = 0 : i64, tpu.core_type = #tpu.core_type<tc>, window_params = [{transform_indices = @transform_0, window_bounds = array<i64: 8, 16>}, {pipeline_mode = #tpu.pipeline_mode<synchronous>, transform_indices = @transform_1, window_bounds = array<i64: 16, 512>}, {pipeline_mode = #tpu.pipeline_mode<synchronous>, transform_indices = @transform_2, window_bounds = array<i64: 128, 128>}, {transform_indices = @transform_3, window_bounds = array<i64: 8, 128>}]} {
    %c0 = arith.constant 0 : index
    %c0_0 = arith.constant 0 : index
    %0 = vector.load %arg1[%c0, %c0_0] : memref<8x16xf32, #tpu.memory_space<vmem>>, vector<8x16xf32>
    %c0_1 = arith.constant 0 : index
    %c0_2 = arith.constant 0 : index
    %1 = vector.load %arg2[%c0_1, %c0_2] : memref<16x512xf32, #tpu.memory_space<vmem>>, vector<16x512xf32>
    %cst = arith.constant dense<0.000000e+00> : vector<8x512xf32>
    %2 = tpu.matmul %0, %1, %cst {dimension_numbers = #tpu.dot_dimension_numbers<[1], [0], [0], [1], [0, 0, 1, 1], [], []>} : vector<8x16xf32>, vector<16x512xf32>, vector<8x512xf32> -> vector<8x512xf32>
    %3 = vector.extract_strided_slice %2 {offsets = [0, 0], sizes = [8, 128], strides = [1, 1]} : vector<8x512xf32> to vector<8x128xf32>
    %4 = vector.extract_strided_slice %2 {offsets = [0, 128], sizes = [8, 128], strides = [1, 1]} : vector<8x512xf32> to vector<8x128xf32>
    %5 = arith.mulf %3, %4 : vector<8x128xf32>
    %6 = vector.extract_strided_slice %2 {offsets = [0, 256], sizes = [8, 128], strides = [1, 1]} : vector<8x512xf32> to vector<8x128xf32>
    %7 = vector.extract_strided_slice %2 {offsets = [0, 384], sizes = [8, 128], strides = [1, 1]} : vector<8x512xf32> to vector<8x128xf32>
    %8 = arith.mulf %6, %7 : vector<8x128xf32>
    %9 = arith.addf %5, %8 : vector<8x128xf32>
    %c0_3 = arith.constant 0 : index
    %c0_4 = arith.constant 0 : index
    %10 = vector.load %arg3[%c0_3, %c0_4] : memref<128x128xf32, #tpu.memory_space<vmem>>, vector<128x128xf32>
    %cst_5 = arith.constant dense<0.000000e+00> : vector<8x128xf32>
    %11 = tpu.matmul %9, %10, %cst_5 {dimension_numbers = #tpu.dot_dimension_numbers<[1], [0], [0], [1], [0, 0, 1, 1], [], []>} : vector<8x128xf32>, vector<128x128xf32>, vector<8x128xf32> -> vector<8x128xf32>
    %c0_6 = arith.constant 0 : index
    %c0_7 = arith.constant 0 : index
    %12 = vector.load %arg4[%c0_6, %c0_7] : memref<8x128xf32, #tpu.memory_space<vmem>>, vector<8x128xf32>
    tpu.vector_store %arg4[%c0_6, %c0_7], %11 {strides = array<i32>} : memref<8x128xf32, #tpu.memory_space<vmem>>, vector<8x128xf32>,
    return
  }
  func.func @transform_0(%arg0: i32) -> (i32, i32) {
    %c0_i32 = arith.constant 0 : i32
    %c0_i32_0 = arith.constant 0 : i32
    return %arg0, %c0_i32 : i32, i32
  }
  func.func @transform_1(%arg0: i32) -> (i32, i32) {
    %c0_i32 = arith.constant 0 : i32
    %c0_i32_0 = arith.constant 0 : i32
    %c0_i32_1 = arith.constant 0 : i32
    return %c0_i32, %c0_i32_0 : i32, i32
  }
  func.func @transform_2(%arg0: i32) -> (i32, i32) {
    %c0_i32 = arith.constant 0 : i32
    %c0_i32_0 = arith.constant 0 : i32
    %c0_i32_1 = arith.constant 0 : i32
    return %c0_i32, %c0_i32_0 : i32, i32
  }
  func.func @transform_3(%arg0: i32) -> (i32, i32) {
    %c0_i32 = arith.constant 0 : i32
    %c0_i32_0 = arith.constant 0 : i32
    return %arg0, %c0_i32 : i32, i32
  }
}

</mosaic_0001>

<llo_original>
// kernel: custom-call.1
$region0: #{custom-call.1}
  %s0 = inlined_call_operand.hbm [shape: c64[4,8], index: 0, kind: input, shape index: {}]
  %s1 = inlined_call_operand.vmem [shape: f32[4,8], index: 1, kind: output, shape index: {}]
  %s2 = scalar_lea.hbm %s0, 64
  $region1: #{custom-call.1} parent=0
    #allocation0 [shape = 's32[1]{0}', space=sflag, size = 0x4, scoped, tag = 'scoped memory for custom-call.1']
    %3 = vsyncpa [#allocation0], 0
    %s4 = sshll.u32 %s1, 4
    %s5 = int_to_ptr.vmem [resolvable:$true] %s4
    %7 = dma.hbm_to_vmem [thread:$0]  %s2, 64, %s5, [#allocation0]
    %8 = dma.done [#allocation0], 64
    %9 = vsyncpa [#allocation0], 1

// kernel: custom-call
$region0: #{custom-call}
  %s0 = inlined_call_operand.hbm [shape: c64[4,8], index: 0, kind: input, shape index: {}]
  %s1 = inlined_call_operand.vmem [shape: f32[4,8], index: 1, kind: output, shape index: {}]
  $region1: #{custom-call} parent=0
    #allocation0 [shape = 's32[1]{0}', space=sflag, size = 0x4, scoped, tag = 'scoped memory for custom-call']
    %2 = vsyncpa [#allocation0], 0
    %s3 = sshll.u32 %s1, 4
    %s4 = int_to_ptr.vmem [resolvable:$true] %s3
    %6 = dma.hbm_to_vmem [thread:$0]  %s0, 64, %s4, [#allocation0]
    %7 = dma.done [#allocation0], 64
    %8 = vsyncpa [#allocation0], 1

// kernel: quantum_decoder_apply.1
$region0: #{quantum_decoder_apply.1}
  #allocation0 [shape = 'u32[]', space=smem, size = 0x4, offset = 0x4, fixed_abs, tag = 'smem constant byte address 0x4 - core index']
  #allocation1 [shape = 'u32[144,128]{1,0:T(1,128)}', space=vmem, size = 0x12000, scoped, tag = 'internal scratch']
  %s0 = inlined_call_operand.vmem [shape: f32[8,16], index: 0, kind: input, shape index: {}]
  %s1 = inlined_call_operand.hbm [shape: f32[16,512], index: 1, kind: input, shape index: {}]
  %s2 = inlined_call_operand.hbm [shape: f32[128,128], index: 2, kind: input, shape index: {}]
  %s3 = inlined_call_operand.vmem [shape: f32[8,128], index: 3, kind: output, shape index: {}]
  %s4 = sld [smem:[#allocation0]]
  $region30: #{quantum_decoder_apply.1} parent=0
    _
  %s6 = ssub.s32 1, %s4
  %s7 = scalar_select 0, %s6, %s4
  $region1: #{quantum_decoder_apply.1} parent=0
    #allocation2 [shape = 'u8[32768]{0}', space=vmem, size = 0x8000, scoped, tag = 'input window, operand 1, single buffered']
    #allocation3 [shape = 's32[1]{0}', space=sflag, size = 0x4, scoped, tag = 'scoped memory for quantum_decoder_apply.1']
    #allocation4 [shape = 'u8[65536]{0}', space=vmem, size = 0x10000, scoped, tag = 'input window, operand 2, single buffered']
    #allocation5 [shape = 's32[1]{0}', space=sflag, size = 0x4, scoped, tag = 'scoped memory for quantum_decoder_apply.1']
    %8 = vsyncpa [#allocation3], 0
    %9 = vsyncpa [#allocation5], 0
    // Predicated region
    $region2: #{quantum_decoder_apply.1} parent=1 // pred_check
      _
    $region3: #{quantum_decoder_apply.1} parent=1 // pred_check_branch
      %11 = sbr.rel (0) target = $region5
    $region4: #{quantum_decoder_apply.1} parent=1 // pred_region
      _
    $region5: #{quantum_decoder_apply.1} parent=1 // pred_fallthru
      _
    // Predicated region
    $region6: #{quantum_decoder_apply.1} parent=1 // pred_check
      _
    $region7: #{quantum_decoder_apply.1} parent=1 // pred_check_branch
      %13 = sbr.rel (0) target = $region9
    $region8: #{quantum_decoder_apply.1} parent=1 // pred_region
      %s15 = ssub.s32 1024, 1024
      %16 = vsyncadd [#allocation3], %s15
      %s17 = sshll.u32 [#allocation2], 4
      %s18 = int_to_ptr.vmem [resolvable:$true] %s17
      %23 = dma.hbm_to_vmem [thread:$0]  %s1, 1024, %s18, [#allocation3], 512, 512, 32
    $region9: #{quantum_decoder_apply.1} parent=1 // pred_fallthru
      _
    // Predicated region
    $region10: #{quantum_decoder_apply.1} parent=1 // pred_check
      _
    $region11: #{quantum_decoder_apply.1} parent=1 // pred_check_branch
      %25 = sbr.rel (0) target = $region13
    $region12: #{quantum_decoder_apply.1} parent=1 // pred_region
      %s27 = ssub.s32 2048, 2048
      %28 = vsyncadd [#allocation5], %s27
      %s29 = sshll.u32 [#allocation4], 4
      %s30 = int_to_ptr.vmem [resolvable:$true] %s29
      %35 = dma.hbm_to_vmem [thread:$0]  %s2, 2048, %s30, [#allocation5], 128, 128, 8
    $region13: #{quantum_decoder_apply.1} parent=1 // pred_fallthru
      _
    // Predicated region
    $region14: #{quantum_decoder_apply.1} parent=1 // pred_check
      _
    $region15: #{quantum_decoder_apply.1} parent=1 // pred_check_branch
      %37 = sbr.rel (0) target = $region17
    $region16: #{quantum_decoder_apply.1} parent=1 // pred_region
      %38 = dma.done [#allocation3], 1024
    $region17: #{quantum_decoder_apply.1} parent=1 // pred_fallthru
      _
    // Predicated region
    $region18: #{quantum_decoder_apply.1} parent=1 // pred_check
      _
    $region19: #{quantum_decoder_apply.1} parent=1 // pred_check_branch
      %40 = sbr.rel (0) target = $region21
    $region20: #{quantum_decoder_apply.1} parent=1 // pred_region
      %41 = dma.done [#allocation5], 2048
    $region21: #{quantum_decoder_apply.1} parent=1 // pred_fallthru
      _
    %v42 = vld [vmem:[%s0] sm:$0xff]
    %v43 = vld [vmem:[#allocation2] sm:$0xff]
    %v44 = vld [vmem:[#allocation2 + $0x8] sm:$0xff]
    %v45 = vld [vmem:[#allocation2 + $0x10] sm:$0xff]
    %v46 = vld [vmem:[#allocation2 + $0x18] sm:$0xff]
    %v47 = vld [vmem:[#allocation2 + $0x20] sm:$0xff]
    %v48 = vld [vmem:[#allocation2 + $0x28] sm:$0xff]
    %v49 = vld [vmem:[#allocation2 + $0x30] sm:$0xff]
    %v50 = vld [vmem:[#allocation2 + $0x38] sm:$0xff]
    %vm51 = vcmask 130048
    %v53 = vsel %vm51, %v42, 0
    %55 = vmatprep.subr.mxu0 %v44
    %56 = vmatpush1.msra.mxu0 %v43
    %57 = vmatprep.subr.mxu0 %v48
    %58 = vmatpush1.msra.mxu0 %v47
    %59 = vmatprep.subr.mxu0 0.0
    %60 = vmatpush1.msra.mxu0 0.0
    %61 = vmatprep.subr.mxu0 0.0
    %62 = vmatpush1.msra.mxu0 0.0
    %63 = vmatprep.subr.mxu0 0.0
    %64 = vmatpush1.msra.mxu0 0.0
    %65 = vmatprep.subr.mxu0 0.0
    %66 = vmatpush1.msra.mxu0 0.0
    %67 = vmatprep.subr.mxu0 0.0
    %68 = vmatpush1.msra.mxu0 0.0
    %69 = vmatprep.subr.mxu0 0.0
    %70 = vmatpush1.msra.mxu0 0.0
    %71 = vmatprep.subr.mxu0 0.0
    %72 = vmatpush1.msra.mxu0 0.0
    %73 = vmatprep.subr.mxu0 0.0
    %74 = vmatpush1.msra.mxu0 0.0
    %75 = vmatprep.subr.mxu0 0.0
    %76 = vmatpush1.msra.mxu0 0.0
    %77 = vmatprep.subr.mxu0 0.0
    %78 = vmatpush1.msra.mxu0 0.0
    %79 = vmatprep.subr.mxu0 0.0
    %80 = vmatpush1.msra.mxu0 0.0
    %81 = vmatprep.subr.mxu0 0.0
    %82 = vmatpush1.msra.mxu0 0.0
    %83 = vmatprep.subr.mxu0 0.0
    %84 = vmatpush1.msra.mxu0 0.0
    %85 = vmatprep.subr.mxu0 0.0
    %86 = vmatpush1.msra.mxu0 0.0
    %87 = vmatprep.subr.mxu0 0.0
    %88 = vmatpush1.msra.mxu0 0.0
    %89 = vmatprep.subr.mxu0 0.0
    %90 = vmatpush1.msra.mxu0 0.0
    %91 = vmatprep.subr.mxu0 0.0
    %92 = vmatpush1.msra.mxu0 0.0
    %93 = vmatprep.subr.mxu0 0.0
    %94 = vmatpush1.msra.mxu0 0.0
    %95 = vmatprep.subr.mxu0 0.0
    %96 = vmatpush1.msra.mxu0 0.0
    %97 = vmatprep.subr.mxu0 0.0
    %98 = vmatpush1.msra.mxu0 0.0
    %99 = vmatprep.subr.mxu0 0.0
    %100 = vmatpush1.msra.mxu0 0.0
    %101 = vmatprep.subr.mxu0 0.0
    %102 = vmatpush1.msra.mxu0 0.0
    %103 = vmatprep.subr.mxu0 0.0
    %104 = vmatpush1.msra.mxu0 0.0
    %105 = vmatprep.subr.mxu0 0.0
    %106 = vmatpush1.msra.mxu0 0.0
    %107 = vmatprep.subr.mxu0 0.0
    %108 = vmatpush1.msra.mxu0 0.0
    %109 = vmatprep.subr.mxu0 0.0
    %110 = vmatpush1.msra.mxu0 0.0
    %111 = vmatprep.subr.mxu0 0.0
    %112 = vmatpush1.msra.mxu0 0.0
    %113 = vmatprep.subr.mxu0 0.0
    %114 = vmatpush1.msra.mxu0 0.0
    %115 = vmatprep.subr.mxu0 0.0
    %116 = vmatpush1.msra.mxu0 0.0
    %117 = vmatprep.subr.mxu0 0.0
    %118 = vmatpush1.msra.mxu0 0.0
    %119 = vmatprep.mubr.f32.mxu0 0.0
    %120 = vmatmul.mubr.f32.gmra.mrb[0].mxu0 %v53
    %v121 = vpop.f32.mrb[0].mxu0
    %v122 = vadd.f32 0.0, %v121
    %v123 = vpop.f32.mrb[0].mxu0
    %v124 = vadd.f32 0.0, %v123
    %125 = vdwg.mxu0
    %126 = vmatprep.subr.mxu0 %v46
    %127 = vmatpush1.msra.mxu0 %v45
    %128 = vmatprep.subr.mxu0 %v50
    %129 = vmatpush1.msra.mxu0 %v49
    %130 = vmatprep.subr.mxu0 0.0
    %131 = vmatpush1.msra.mxu0 0.0
    %132 = vmatprep.subr.mxu0 0.0
    %133 = vmatpush1.msra.mxu0 0.0
    %134 = vmatprep.subr.mxu0 0.0
    %135 = vmatpush1.msra.mxu0 0.0
    %136 = vmatprep.subr.mxu0 0.0
    %137 = vmatpush1.msra.mxu0 0.0
    %138 = vmatprep.subr.mxu0 0.0
    %139 = vmatpush1.msra.mxu0 0.0
    %140 = vmatprep.subr.mxu0 0.0
    %141 = vmatpush1.msra.mxu0 0.0
    %142 = vmatprep.subr.mxu0 0.0
    %143 = vmatpush1.msra.mxu0 0.0
    %144 = vmatprep.subr.mxu0 0.0
    %145 = vmatpush1.msra.mxu0 0.0
    %146 = vmatprep.subr.mxu0 0.0
    %147 = vmatpush1.msra.mxu0 0.0
    %148 = vmatprep.subr.mxu0 0.0
    %149 = vmatpush1.msra.mxu0 0.0
    %150 = vmatprep.subr.mxu0 0.0
    %151 = vmatpush1.msra.mxu0 0.0
    %152 = vmatprep.subr.mxu0 0.0
    %153 = vmatpush1.msra.mxu0 0.0
    %154 = vmatprep.subr.mxu0 0.0
    %155 = vmatpush1.msra.mxu0 0.0
    %156 = vmatprep.subr.mxu0 0.0
    %157 = vmatpush1.msra.mxu0 0.0
    %158 = vmatprep.subr.mxu0 0.0
    %159 = vmatpush1.msra.mxu0 0.0
    %160 = vmatprep.subr.mxu0 0.0
    %161 = vmatpush1.msra.mxu0 0.0
    %162 = vmatprep.subr.mxu0 0.0
    %163 = vmatpush1.msra.mxu0 0.0
    %164 = vmatprep.subr.mxu0 0.0
    %165 = vmatpush1.msra.mxu0 0.0
    %166 = vmatprep.subr.mxu0 0.0
    %167 = vmatpush1.msra.mxu0 0.0
    %168 = vmatprep.subr.mxu0 0.0
    %169 = vmatpush1.msra.mxu0 0.0
    %170 = vmatprep.subr.mxu0 0.0
    %171 = vmatpush1.msra.mxu0 0.0
    %172 = vmatprep.subr.mxu0 0.0
    %173 = vmatpush1.msra.mxu0 0.0
    %174 = vmatprep.subr.mxu0 0.0
    %175 = vmatpush1.msra.mxu0 0.0
    %176 = vmatprep.subr.mxu0 0.0
    %177 = vmatpush1.msra.mxu0 0.0
    %178 = vmatprep.subr.mxu0 0.0
    %179 = vmatpush1.msra.mxu0 0.0
    %180 = vmatprep.subr.mxu0 0.0
    %181 = vmatpush1.msra.mxu0 0.0
    %182 = vmatprep.subr.mxu0 0.0
    %183 = vmatpush1.msra.mxu0 0.0
    %184 = vmatprep.subr.mxu0 0.0
    %185 = vmatpush1.msra.mxu0 0.0
    %186 = vmatprep.subr.mxu0 0.0
    %187 = vmatpush1.msra.mxu0 0.0
    %188 = vmatprep.subr.mxu0 0.0
    %189 = vmatpush1.msra.mxu0 0.0
    %190 = vmatprep.mubr.f32.mxu0 0.0
    %191 = vmatmul.mubr.f32.gmra.mrb[0].mxu0 %v53
    %v192 = vpop.f32.mrb[0].mxu0
    %v193 = vadd.f32 0.0, %v192
    %v194 = vpop.f32.mrb[0].mxu0
    %v195 = vadd.f32 0.0, %v194
    %196 = vdwg.mxu0
    %v197 = vmul.f32 %v122, %v124
    %v198 = vmul.f32 %v193, %v195
    %v199 = vadd.f32 %v197, %v198
    %v200 = vld [vmem:[#allocation4] sm:$0xff]
    %v201 = vld [vmem:[#allocation4 + $0x8] sm:$0xff]
    %v202 = vld [vmem:[#allocation4 + $0x10] sm:$0xff]
    %v203 = vld [vmem:[#allocation4 + $0x18] sm:$0xff]
    %v204 = vld [vmem:[#allocation4 + $0x20] sm:$0xff]
    %v205 = vld [vmem:[#allocation4 + $0x28] sm:$0xff]
    %v206 = vld [vmem:[#allocation4 + $0x30] sm:$0xff]
    %v207 = vld [vmem:[#allocation4 + $0x38] sm:$0xff]
    %v208 = vld [vmem:[#allocation4 + $0x40] sm:$0xff]
    %v209 = vld [vmem:[#allocation4 + $0x48] sm:$0xff]
    %v210 = vld [vmem:[#allocation4 + $0x50] sm:$0xff]
    %v211 = vld [vmem:[#allocation4 + $0x58] sm:$0xff]
    %v212 = vld [vmem:[#allocation4 + $0x60] sm:$0xff]
    %v213 = vld [vmem:[#allocation4 + $0x68] sm:$0xff]
    %v214 = vld [vmem:[#allocation4 + $0x70] sm:$0xff]
    %v215 = vld [vmem:[#allocation4 + $0x78] sm:$0xff]
    %216 = vmatprep.subr.mxu0 0.0
    %217 = vmatpush1.msra.mxu0 %v200
    %218 = vmatprep.subr.mxu0 0.0
    %219 = vmatpush1.msra.mxu0 %v201
    %220 = vmatprep.subr.mxu0 0.0
    %221 = vmatpush1.msra.mxu0 %v202
    %222 = vmatprep.subr.mxu0 0.0
    %223 = vmatpush1.msra.mxu0 %v203
    %224 = vmatprep.subr.mxu0 0.0
    %225 = vmatpush1.msra.mxu0 %v204
    %226 = vmatprep.subr.mxu0 0.0
    %227 = vmatpush1.msra.mxu0 %v205
    %228 = vmatprep.subr.mxu0 0.0
    %229 = vmatpush1.msra.mxu0 %v206
    %230 = vmatprep.subr.mxu0 0.0
    %231 = vmatpush1.msra.mxu0 %v207
    %232 = vmatprep.subr.mxu0 0.0
    %233 = vmatpush1.msra.mxu0 %v208
    %234 = vmatprep.subr.mxu0 0.0
    %235 = vmatpush1.msra.mxu0 %v209
    %236 = vmatprep.subr.mxu0 0.0
    %237 = vmatpush1.msra.mxu0 %v210
    %238 = vmatprep.subr.mxu0 0.0
    %239 = vmatpush1.msra.mxu0 %v211
    %240 = vmatprep.subr.mxu0 0.0
    %241 = vmatpush1.msra.mxu0 %v212
    %242 = vmatprep.subr.mxu0 0.0
    %243 = vmatpush1.msra.mxu0 %v213
    %244 = vmatprep.subr.mxu0 0.0
    %245 = vmatpush1.msra.mxu0 %v214
    %246 = vmatprep.subr.mxu0 0.0
    %247 = vmatpush1.msra.mxu0 %v215
    %248 = vmatprep.subr.mxu0 0.0
    %249 = vmatpush1.msra.mxu0 0.0
    %250 = vmatprep.subr.mxu0 0.0
    %251 = vmatpush1.msra.mxu0 0.0
    %252 = vmatprep.subr.mxu0 0.0
    %253 = vmatpush1.msra.mxu0 0.0
    %254 = vmatprep.subr.mxu0 0.0
    %255 = vmatpush1.msra.mxu0 0.0
    %256 = vmatprep.subr.mxu0 0.0
    %257 = vmatpush1.msra.mxu0 0.0
    %258 = vmatprep.subr.mxu0 0.0
    %259 = vmatpush1.msra.mxu0 0.0
    %260 = vmatprep.subr.mxu0 0.0
    %261 = vmatpush1.msra.mxu0 0.0
    %262 = vmatprep.subr.mxu0 0.0
    %263 = vmatpush1.msra.mxu0 0.0
    %264 = vmatprep.subr.mxu0 0.0
    %265 = vmatpush1.msra.mxu0 0.0
    %266 = vmatprep.subr.mxu0 0.0
    %267 = vmatpush1.msra.mxu0 0.0
    %268 = vmatprep.subr.mxu0 0.0
    %269 = vmatpush1.msra.mxu0 0.0
    %270 = vmatprep.subr.mxu0 0.0
    %271 = vmatpush1.msra.mxu0 0.0
    %272 = vmatprep.subr.mxu0 0.0
    %273 = vmatpush1.msra.mxu0 0.0
    %274 = vmatprep.subr.mxu0 0.0
    %275 = vmatpush1.msra.mxu0 0.0
    %276 = vmatprep.subr.mxu0 0.0
    %277 = vmatpush1.msra.mxu0 0.0
    %278 = vmatprep.subr.mxu0 0.0
    %279 = vmatpush1.msra.mxu0 0.0
    %280 = vmatprep.mubr.f32.mxu0 0.0
    %281 = vmatmul.mubr.f32.gmra.mrb[0].mxu0 %v199
    %v282 = vpop.f32.mrb[0].mxu0
    %v283 = vadd.f32 0.0, %v282
    %v284 = vpop.f32.mrb[0].mxu0
    %285 = vdwg.mxu0
    %286 = vst [vmem:[%s3] sm:$0xff] %v283
    // Predicated region
    $region22: #{quantum_decoder_apply.1} parent=1 // pred_check
      _
    $region23: #{quantum_decoder_apply.1} parent=1 // pred_check_branch
      %288 = sbr.rel (0) target = $region25
    $region24: #{quantum_decoder_apply.1} parent=1 // pred_region
      _
    $region25: #{quantum_decoder_apply.1} parent=1 // pred_fallthru
      _
    // Predicated region
    $region26: #{quantum_decoder_apply.1} parent=1 // pred_check
      _
    $region27: #{quantum_decoder_apply.1} parent=1 // pred_check_branch
      %290 = sbr.rel (0) target = $region29
    $region28: #{quantum_decoder_apply.1} parent=1 // pred_region
      _
    $region29: #{quantum_decoder_apply.1} parent=1 // pred_fallthru
      _
    %291 = vsyncpa [#allocation3], 1
    %292 = vsyncpa [#allocation5], 1

</llo_original>
